<compile_context>
chip_gen: v6e
topology: v6e:2x2x1
jax: 0.10.0
libtpu: 0.0.40
codegen_flags: <defaults>
</compile_context>

<pallas_src>
import functools
import math

import jax
import jax.numpy as jnp
from jax.experimental import pallas as pl
from jax.experimental.pallas import tpu as pltpu


def _round_up(x, m):
    return ((x + m - 1) // m) * m


def _leaky_relu(v):
    return jnp.where(v > 0, v, 0.01 * v)


# ---------------------------------------------------------------------------
# Kernels
# ---------------------------------------------------------------------------
def _make_resident_kernel(num_hidden_layers: int, compute_dtype):
    """All weights VMEM-resident; stacked layers statically unrolled."""
    if num_hidden_layers > 0:

        def kernel(xh_ref, w_first_ref, b_first_ref,
                   w_hl_ref, b_hl_ref,
                   w_out_ref, b_out_ref,
                   out_ref, hid_ref):
            # Fused first layer: [x | prev_hidden] @ [W_ih ; W_sr] + (b_ih+b_sr)
            h = _leaky_relu(
                jnp.dot(xh_ref[...], w_first_ref[...],
                        preferred_element_type=jnp.float32)
                + b_first_ref[...])
            # Stacked hidden layers (static unroll, weights already resident).
            for i in range(num_hidden_layers):
                z = (jnp.dot(h.astype(compute_dtype), w_hl_ref[i],
                             preferred_element_type=jnp.float32)
                     + b_hl_ref[i])
                h = _leaky_relu(z)
            out = (jnp.dot(h.astype(compute_dtype), w_out_ref[...],
                           preferred_element_type=jnp.float32)
                   + b_out_ref[...])
            out_ref[...] = out.astype(out_ref.dtype)
            hid_ref[...] = h.astype(hid_ref.dtype)

        return kernel

    def kernel(xh_ref, w_first_ref, b_first_ref,
               w_out_ref, b_out_ref,
               out_ref, hid_ref):
        h = _leaky_relu(
            jnp.dot(xh_ref[...], w_first_ref[...],
                    preferred_element_type=jnp.float32)
            + b_first_ref[...])
        out = (jnp.dot(h.astype(compute_dtype), w_out_ref[...],
                       preferred_element_type=jnp.float32)
               + b_out_ref[...])
        out_ref[...] = out.astype(out_ref.dtype)
        hid_ref[...] = h.astype(hid_ref.dtype)

    return kernel


def _make_streamed_kernel(compute_dtype):
    """One stacked hidden layer per grid step; layer weights streamed."""

    def kernel(xh_ref, w_first_ref, b_first_ref,
               w_hl_ref, b_hl_ref,
               w_out_ref, b_out_ref,
               out_ref, hid_ref,
               h_acc):
        l = pl.program_id(1)

        @pl.when(l == 0)
        def _():
            pre = (jnp.dot(xh_ref[...], w_first_ref[...],
                           preferred_element_type=jnp.float32)
                   + b_first_ref[...])
            h_acc[...] = _leaky_relu(pre)

        z = (jnp.dot(h_acc[...].astype(compute_dtype), w_hl_ref[...],
                     preferred_element_type=jnp.float32)
             + b_hl_ref[...])
        h_acc[...] = _leaky_relu(z)

        @pl.when(l == pl.num_programs(1) - 1)
        def _():
            h = h_acc[...]
            out = (jnp.dot(h.astype(compute_dtype), w_out_ref[...],
                           preferred_element_type=jnp.float32)
                   + b_out_ref[...])
            out_ref[...] = out.astype(out_ref.dtype)
            hid_ref[...] = h.astype(hid_ref.dtype)

    return kernel


# ---------------------------------------------------------------------------
# Parameter prep (fuse / fold / pad / cast once, outside the hot path)
# ---------------------------------------------------------------------------
def prepare_drnn_params(params, compute_dtype=jnp.float32):
    """Fuse first layer, fold biases, pad to 128-multiples, cast weights."""
    w_ih, w_sr, w_out = params["w_ih"], params["w_sr"], params["w_out"]
    input_size, h2 = w_ih.shape
    out_features = w_out.shape[1]

    k_pad = _round_up(input_size + h2, 128)
    h2_pad = _round_up(h2, 128)
    out_pad = _round_up(out_features, 128)

    def pad2(a, rows, cols):
        return jnp.pad(a, ((0, rows - a.shape[0]), (0, cols - a.shape[1])))

    w_first = jnp.concatenate([w_ih, w_sr], axis=0)              # [in+h2, h2]
    prep = {
        "w_first": pad2(w_first, k_pad, h2_pad).astype(compute_dtype),
        "b_first": pad2(params["b_ih"] + params["b_sr"], 1, h2_pad)
                   .astype(jnp.float32),
        "w_out": pad2(w_out, h2_pad, out_pad).astype(compute_dtype),
        "b_out": pad2(params["b_out"], 1, out_pad).astype(jnp.float32),
    }
    if "w_hl" in params:
        w_hl = jnp.pad(params["w_hl"],
                       ((0, 0), (0, h2_pad - h2), (0, h2_pad - h2)))
        b_hl = jnp.pad(params["b_hl"], ((0, 0), (0, 0), (0, h2_pad - h2)))
        prep["w_hl"] = w_hl.astype(compute_dtype)
        prep["b_hl"] = b_hl.astype(jnp.float32)
    return prep


# ---------------------------------------------------------------------------
# Forward wrapper
# ---------------------------------------------------------------------------
def drnn_forward(prep, x, prev_hidden, *, output_size,
                 compute_dtype=jnp.float32, batch_tile=256, mode="auto"):
    """DRNN forward via a single batch-tiled Pallas call.

    mode: "auto" | "resident" | "streamed".
    """
    batch, input_size = x.shape
    h2 = prev_hidden.shape[1]
    k_pad, h2_pad = prep["w_first"].shape
    out_pad = prep["w_out"].shape[1]
    nh = prep["w_hl"].shape[0] if "w_hl" in prep else 0

    # Batch tiling (>=16 rows so bf16 sublane packing is always legal).
    tb = min(int(batch_tile), _round_up(batch, 16))
    b_pad = _round_up(batch, tb)
    n_batch_tiles = b_pad // tb

    # Concatenate + pad activations once in the wrapper (lane-dense K).
    xh = jnp.zeros((b_pad, k_pad), compute_dtype)
    xh = xh.at[:batch, :input_size].set(x.astype(compute_dtype))
    xh = xh.at[:batch, input_size:input_size + h2].set(
        prev_hidden.astype(compute_dtype))

    # VMEM footprints (BlockSpec double-buffers each operand).
    csz = jnp.dtype(compute_dtype).itemsize
    act_bytes = 2 * tb * k_pad * csz + 2 * tb * (out_pad + h2_pad) * 4
    first_out_w_bytes = (k_pad * h2_pad + h2_pad * out_pad) * csz \
        + (h2_pad + out_pad) * 4
    resident_w_bytes = first_out_w_bytes + nh * (h2_pad * h2_pad * csz
                                                 + h2_pad * 4)
    resident_footprint = 2 * resident_w_bytes + act_bytes + (4 << 20)
    streamed_footprint = (2 * first_out_w_bytes
                          + 2 * (h2_pad * h2_pad * csz + h2_pad * 4)
                          + act_bytes + tb * h2_pad * 4 + (4 << 20))

    if mode == "auto":
        use_resident = (nh == 0) or (resident_footprint <= (48 << 20))
    else:
        use_resident = (mode == "resident") or (nh == 0)

    out_shape = (
        jax.ShapeDtypeStruct((b_pad, out_pad), jnp.float32),
        jax.ShapeDtypeStruct((b_pad, h2_pad), jnp.float32),
    )

    if use_resident:
        kernel = _make_resident_kernel(nh, compute_dtype)
        inputs = [xh, prep["w_first"], prep["b_first"]]
        in_specs = [
            pl.BlockSpec((tb, k_pad), lambda b: (b, 0)),          # batch-tiled
            pl.BlockSpec((k_pad, h2_pad), lambda b: (0, 0)),      # resident
            pl.BlockSpec((1, h2_pad), lambda b: (0, 0)),
        ]
        if nh > 0:
            inputs += [prep["w_hl"], prep["b_hl"]]
            in_specs += [
                pl.BlockSpec((nh, h2_pad, h2_pad), lambda b: (0, 0, 0)),
                pl.BlockSpec((nh, 1, h2_pad), lambda b: (0, 0, 0)),
            ]
        inputs += [prep["w_out"], prep["b_out"]]
        in_specs += [
            pl.BlockSpec((h2_pad, out_pad), lambda b: (0, 0)),
            pl.BlockSpec((1, out_pad), lambda b: (0, 0)),
        ]
        grid = (n_batch_tiles,)
        out_specs = (
            pl.BlockSpec((tb, out_pad), lambda b: (b, 0)),
            pl.BlockSpec((tb, h2_pad), lambda b: (b, 0)),
        )
        scratch_shapes = []
        dim_sem = ("parallel",)
        vmem_limit = int(min(max(resident_footprint, 32 << 20), 64 << 20))
    else:
        kernel = _make_streamed_kernel(compute_dtype)
        inputs = [xh, prep["w_first"], prep["b_first"],
                  prep["w_hl"], prep["b_hl"],
                  prep["w_out"], prep["b_out"]]
        in_specs = [
            pl.BlockSpec((tb, k_pad), lambda b, l: (b, 0)),       # batch-tiled
            pl.BlockSpec((k_pad, h2_pad), lambda b, l: (0, 0)),   # resident
            pl.BlockSpec((1, h2_pad), lambda b, l: (0, 0)),
            pl.BlockSpec((None, h2_pad, h2_pad), lambda b, l: (l, 0, 0)),
            pl.BlockSpec((None, 1, h2_pad), lambda b, l: (l, 0, 0)),
            pl.BlockSpec((h2_pad, out_pad), lambda b, l: (0, 0)),
            pl.BlockSpec((1, out_pad), lambda b, l: (0, 0)),
        ]
        grid = (n_batch_tiles, nh)
        out_specs = (
            pl.BlockSpec((tb, out_pad), lambda b, l: (b, 0)),
            pl.BlockSpec((tb, h2_pad), lambda b, l: (b, 0)),
        )
        scratch_shapes = [pltpu.VMEM((tb, h2_pad), jnp.float32)]
        dim_sem = ("parallel", "arbitrary")
        vmem_limit = int(min(max(streamed_footprint, 32 << 20), 64 << 20))

    out, hid = pl.pallas_call(
        kernel,
        out_shape=out_shape,
        grid_spec=pltpu.PrefetchScalarGridSpec(
            num_scalar_prefetch=0,
            grid=grid,
            in_specs=in_specs,
            out_specs=out_specs,
            scratch_shapes=scratch_shapes,
        ),
        compiler_params=pltpu.CompilerParams(
            dimension_semantics=dim_sem,
            vmem_limit_bytes=vmem_limit,
        ),
    )(*inputs)

    return out[:batch, :output_size], hid[:batch, :h2]


# ---------------------------------------------------------------------------
# Init + reference (for correctness checks)
# ---------------------------------------------------------------------------
def xavier_uniform(key, fan_in, fan_out):
    """Matches torch.nn.init.xavier_uniform_ (already transposed for x @ W)."""
    bound = math.sqrt(6.0 / (fan_in + fan_out))
    return jax.random.uniform(key, (fan_in, fan_out), jnp.float32, -bound, bound)


def init_drnn_params(key, input_size, hidden_size, output_size, num_layers=2):
    h2 = hidden_size * 2
    n_hidden = num_layers - 1
    keys = jax.random.split(key, 3 + max(n_hidden, 1))

    params = {
        "w_ih": xavier_uniform(keys[0], input_size, h2),
        "b_ih": jnp.zeros((1, h2), jnp.float32),
        "w_sr": xavier_uniform(keys[1], h2, h2),
        "b_sr": jnp.zeros((1, h2), jnp.float32),
        "w_out": xavier_uniform(keys[2], h2, output_size),
        "b_out": jnp.zeros((1, output_size), jnp.float32),
    }
    if n_hidden > 0:
        params["w_hl"] = jnp.stack(
            [xavier_uniform(keys[3 + i], h2, h2) for i in range(n_hidden)],
            axis=0)
        params["b_hl"] = jnp.zeros((n_hidden, 1, h2), jnp.float32)
    return params


def drnn_reference(params, x, prev_hidden, *, num_layers):
    h = _leaky_relu(x @ params["w_ih"] + params["b_ih"]
                    + prev_hidden @ params["w_sr"] + params["b_sr"])
    for i in range(num_layers - 1):
        h = _leaky_relu(h @ params["w_hl"][i] + params["b_hl"][i])
    out = h @ params["w_out"] + params["b_out"]
    return out, h


# ---------------------------------------------------------------------------
# Self-test
# ---------------------------------------------------------------------------
if __name__ == "__main__":
    batch = 2
    input_size = 16
    hidden_size = 32      # -> internal width 64
    output_size = 8

    key = jax.random.PRNGKey(0)
    k_param, k_x, k_h, k_param3 = jax.random.split(key, 4)

    x = jax.random.normal(k_x, (batch, input_size), jnp.float32)
    prev_hidden = jax.random.normal(k_h, (batch, hidden_size * 2), jnp.float32)

    # --- num_layers=2, f32, resident path (exact vs. reference) ---
    params2 = init_drnn_params(k_param, input_size, hidden_size, output_size,
                               num_layers=2)
    ref_out2, ref_hid2 = drnn_reference(params2, x, prev_hidden, num_layers=2)

    prep2_f32 = prepare_drnn_params(params2, compute_dtype=jnp.float32)
    fwd2_f32 = jax.jit(functools.partial(
        drnn_forward, output_size=output_size, compute_dtype=jnp.float32))
    out, hidden = fwd2_f32(prep2_f32, x, prev_hidden)
    jax.block_until_ready((out, hidden))
    assert out.shape == (batch, output_size)
    assert hidden.shape == (batch, hidden_size * 2)
    assert jnp.allclose(out, ref_out2, atol=1e-4, rtol=1e-4)
    assert jnp.allclose(hidden, ref_hid2, atol=1e-4, rtol=1e-4)

    # --- num_layers=2, bf16 weights/activations, f32 accumulation ---
    prep2_bf16 = prepare_drnn_params(params2, compute_dtype=jnp.bfloat16)
    fwd2_bf16 = jax.jit(functools.partial(
        drnn_forward, output_size=output_size, compute_dtype=jnp.bfloat16))
    out_bf, hid_bf = fwd2_bf16(prep2_bf16, x, prev_hidden)
    jax.block_until_ready((out_bf, hid_bf))
    assert jnp.allclose(out_bf, ref_out2, atol=1e-1, rtol=1e-1)
    assert jnp.allclose(hid_bf, ref_hid2, atol=1e-1, rtol=1e-1)

    # --- num_layers=3: exercise stacked-layer unroll (resident) and the
    #     layer-streamed fallback path ---
    params3 = init_drnn_params(k_param3, input_size, hidden_size, output_size,
                               num_layers=3)
    ref_out3, ref_hid3 = drnn_reference(params3, x, prev_hidden, num_layers=3)
    prep3 = prepare_drnn_params(params3, compute_dtype=jnp.float32)

    fwd3_res = jax.jit(functools.partial(
        drnn_forward, output_size=output_size, compute_dtype=jnp.float32,
        mode="resident"))
    out3r, hid3r = fwd3_res(prep3, x, prev_hidden)
    jax.block_until_ready((out3r, hid3r))
    assert jnp.allclose(out3r, ref_out3, atol=1e-4, rtol=1e-4)
    assert jnp.allclose(hid3r, ref_hid3, atol=1e-4, rtol=1e-4)

    fwd3_str = jax.jit(functools.partial(
        drnn_forward, output_size=output_size, compute_dtype=jnp.float32,
        mode="streamed"))
    out3s, hid3s = fwd3_str(prep3, x, prev_hidden)
    jax.block_until_ready((out3s, hid3s))
    assert jnp.allclose(out3s, ref_out3, atol=1e-4, rtol=1e-4)
    assert jnp.allclose(hid3s, ref_hid3, atol=1e-4, rtol=1e-4)

    print("KERNEL_OK")
</pallas_src>

<mosaic_0001>
module attributes {stable_mosaic.version = 11 : i64} {
  func.func @kernel(%arg0: i32, %arg1: memref<16x128xf32, #tpu.memory_space<vmem>>, %arg2: memref<128x128xf32, #tpu.memory_space<vmem>>, %arg3: memref<1x128xf32, #tpu.memory_space<vmem>>, %arg4: memref<1x128x128xf32, #tpu.memory_space<vmem>>, %arg5: memref<1x1x128xf32, #tpu.memory_space<vmem>>, %arg6: memref<128x128xf32, #tpu.memory_space<vmem>>, %arg7: memref<1x128xf32, #tpu.memory_space<vmem>>, %arg8: memref<16x128xf32, #tpu.memory_space<vmem>>, %arg9: memref<16x128xf32, #tpu.memory_space<vmem>>) attributes {dimension_semantics = [#tpu.dimension_semantics<parallel>], iteration_bounds = array<i64: 1>, scalar_prefetch = 0 : i64, scratch_operands = 0 : i64, tpu.core_type = #tpu.core_type<tc>, window_params = [{transform_indices = @transform_0, window_bounds = array<i64: 16, 128>}, {pipeline_mode = #tpu.pipeline_mode<synchronous>, transform_indices = @transform_1, window_bounds = array<i64: 128, 128>}, {pipeline_mode = #tpu.pipeline_mode<synchronous>, transform_indices = @transform_2, window_bounds = array<i64: 1, 128>}, {pipeline_mode = #tpu.pipeline_mode<synchronous>, transform_indices = @transform_3, window_bounds = array<i64: 1, 128, 128>}, {pipeline_mode = #tpu.pipeline_mode<synchronous>, transform_indices = @transform_4, window_bounds = array<i64: 1, 1, 128>}, {pipeline_mode = #tpu.pipeline_mode<synchronous>, transform_indices = @transform_5, window_bounds = array<i64: 128, 128>}, {pipeline_mode = #tpu.pipeline_mode<synchronous>, transform_indices = @transform_6, window_bounds = array<i64: 1, 128>}, {transform_indices = @transform_7, window_bounds = array<i64: 16, 128>}, {transform_indices = @transform_8, window_bounds = array<i64: 16, 128>}]} {
    %c0 = arith.constant 0 : index
    %c0_0 = arith.constant 0 : index
    %0 = vector.load %arg1[%c0, %c0_0] : memref<16x128xf32, #tpu.memory_space<vmem>>, vector<16x128xf32>
    %c0_1 = arith.constant 0 : index
    %c0_2 = arith.constant 0 : index
    %1 = vector.load %arg2[%c0_1, %c0_2] : memref<128x128xf32, #tpu.memory_space<vmem>>, vector<128x128xf32>
    %cst = arith.constant dense<0.000000e+00> : vector<16x128xf32>
    %2 = tpu.matmul %0, %1, %cst {dimension_numbers = #tpu.dot_dimension_numbers<[1], [0], [0], [1], [0, 0, 1, 1], [], []>} : vector<16x128xf32>, vector<128x128xf32>, vector<16x128xf32> -> vector<16x128xf32>
    %c0_3 = arith.constant 0 : index
    %c0_4 = arith.constant 0 : index
    %3 = vector.load %arg3[%c0_3, %c0_4] : memref<1x128xf32, #tpu.memory_space<vmem>>, vector<1x128xf32>
    %4 = vector.broadcast %3 : vector<1x128xf32> to vector<16x128xf32>
    %5 = arith.addf %2, %4 : vector<16x128xf32>
    %cst_5 = arith.constant 0.000000e+00 : f32
    %6 = vector.broadcast %cst_5 : f32 to vector<16x128xf32>
    %7 = arith.cmpf ogt, %5, %6 : vector<16x128xf32>
    %cst_6 = arith.constant 0.00999999977 : f32
    %8 = vector.broadcast %cst_6 : f32 to vector<16x128xf32>
    %9 = arith.mulf %8, %5 : vector<16x128xf32>
    %10 = arith.select %7, %5, %9 : vector<16x128xi1>, vector<16x128xf32>
    %c0_7 = arith.constant 0 : index
    %c0_8 = arith.constant 0 : index
    %c0_9 = arith.constant 0 : index
    %11 = vector.load %arg4[%c0_7, %c0_8, %c0_9] : memref<1x128x128xf32, #tpu.memory_space<vmem>>, vector<1x128x128xf32>
    %12 = vector.shape_cast %11 : vector<1x128x128xf32> to vector<128x128xf32>
    %cst_10 = arith.constant dense<0.000000e+00> : vector<16x128xf32>
    %13 = tpu.matmul %10, %12, %cst_10 {dimension_numbers = #tpu.dot_dimension_numbers<[1], [0], [0], [1], [0, 0, 1, 1], [], []>} : vector<16x128xf32>, vector<128x128xf32>, vector<16x128xf32> -> vector<16x128xf32>
    %c0_11 = arith.constant 0 : index
    %c0_12 = arith.constant 0 : index
    %c0_13 = arith.constant 0 : index
    %14 = vector.load %arg5[%c0_11, %c0_12, %c0_13] : memref<1x1x128xf32, #tpu.memory_space<vmem>>, vector<1x1x128xf32>
    %15 = vector.shape_cast %14 : vector<1x1x128xf32> to vector<1x128xf32>
    %16 = vector.broadcast %15 : vector<1x128xf32> to vector<16x128xf32>
    %17 = arith.addf %13, %16 : vector<16x128xf32>
    %cst_14 = arith.constant 0.000000e+00 : f32
    %18 = vector.broadcast %cst_14 : f32 to vector<16x128xf32>
    %19 = arith.cmpf ogt, %17, %18 : vector<16x128xf32>
    %cst_15 = arith.constant 0.00999999977 : f32
    %20 = vector.broadcast %cst_15 : f32 to vector<16x128xf32>
    %21 = arith.mulf %20, %17 : vector<16x128xf32>
    %22 = arith.select %19, %17, %21 : vector<16x128xi1>, vector<16x128xf32>
    %c0_16 = arith.constant 0 : index
    %c0_17 = arith.constant 0 : index
    %23 = vector.load %arg6[%c0_16, %c0_17] : memref<128x128xf32, #tpu.memory_space<vmem>>, vector<128x128xf32>
    %cst_18 = arith.constant dense<0.000000e+00> : vector<16x128xf32>
    %24 = tpu.matmul %22, %23, %cst_18 {dimension_numbers = #tpu.dot_dimension_numbers<[1], [0], [0], [1], [0, 0, 1, 1], [], []>} : vector<16x128xf32>, vector<128x128xf32>, vector<16x128xf32> -> vector<16x128xf32>
    %c0_19 = arith.constant 0 : index
    %c0_20 = arith.constant 0 : index
    %25 = vector.load %arg7[%c0_19, %c0_20] : memref<1x128xf32, #tpu.memory_space<vmem>>, vector<1x128xf32>
    %26 = vector.broadcast %25 : vector<1x128xf32> to vector<16x128xf32>
    %27 = arith.addf %24, %26 : vector<16x128xf32>
    %c0_21 = arith.constant 0 : index
    %c0_22 = arith.constant 0 : index
    %28 = vector.load %arg8[%c0_21, %c0_22] : memref<16x128xf32, #tpu.memory_space<vmem>>, vector<16x128xf32>
    tpu.vector_store %arg8[%c0_21, %c0_22], %27 {strides = array<i32>} : memref<16x128xf32, #tpu.memory_space<vmem>>, vector<16x128xf32>,
    %c0_23 = arith.constant 0 : index
    %c0_24 = arith.constant 0 : index
    %29 = vector.load %arg9[%c0_23, %c0_24] : memref<16x128xf32, #tpu.memory_space<vmem>>, vector<16x128xf32>
    tpu.vector_store %arg9[%c0_23, %c0_24], %22 {strides = array<i32>} : memref<16x128xf32, #tpu.memory_space<vmem>>, vector<16x128xf32>,
    return
  }
  func.func @transform_0(%arg0: i32) -> (i32, i32) {
    %c0_i32 = arith.constant 0 : i32
    %c0_i32_0 = arith.constant 0 : i32
    return %arg0, %c0_i32 : i32, i32
  }
  func.func @transform_1(%arg0: i32) -> (i32, i32) {
    %c0_i32 = arith.constant 0 : i32
    %c0_i32_0 = arith.constant 0 : i32
    %c0_i32_1 = arith.constant 0 : i32
    return %c0_i32, %c0_i32_0 : i32, i32
  }
  func.func @transform_2(%arg0: i32) -> (i32, i32) {
    %c0_i32 = arith.constant 0 : i32
    %c0_i32_0 = arith.constant 0 : i32
    %c0_i32_1 = arith.constant 0 : i32
    return %c0_i32, %c0_i32_0 : i32, i32
  }
  func.func @transform_3(%arg0: i32) -> (i32, i32, i32) {
    %c0_i32 = arith.constant 0 : i32
    %c0_i32_0 = arith.constant 0 : i32
    %c0_i32_1 = arith.constant 0 : i32
    %c0_i32_2 = arith.constant 0 : i32
    return %c0_i32, %c0_i32_0, %c0_i32_1 : i32, i32, i32
  }
  func.func @transform_4(%arg0: i32) -> (i32, i32, i32) {
    %c0_i32 = arith.constant 0 : i32
    %c0_i32_0 = arith.constant 0 : i32
    %c0_i32_1 = arith.constant 0 : i32
    %c0_i32_2 = arith.constant 0 : i32
    return %c0_i32, %c0_i32_0, %c0_i32_1 : i32, i32, i32
  }
  func.func @transform_5(%arg0: i32) -> (i32, i32) {
    %c0_i32 = arith.constant 0 : i32
    %c0_i32_0 = arith.constant 0 : i32
    %c0_i32_1 = arith.constant 0 : i32
    return %c0_i32, %c0_i32_0 : i32, i32
  }
  func.func @transform_6(%arg0: i32) -> (i32, i32) {
    %c0_i32 = arith.constant 0 : i32
    %c0_i32_0 = arith.constant 0 : i32
    %c0_i32_1 = arith.constant 0 : i32
    return %c0_i32, %c0_i32_0 : i32, i32
  }
  func.func @transform_7(%arg0: i32) -> (i32, i32) {
    %c0_i32 = arith.constant 0 : i32
    %c0_i32_0 = arith.constant 0 : i32
    return %arg0, %c0_i32 : i32, i32
  }
  func.func @transform_8(%arg0: i32) -> (i32, i32) {
    %c0_i32 = arith.constant 0 : i32
    %c0_i32_0 = arith.constant 0 : i32
    return %arg0, %c0_i32 : i32, i32
  }
}

</mosaic_0001>

<llo_original>
// kernel: drnn_forward.1
$region0: #{drnn_forward.1}
  #allocation0 [shape = 'u32[]', space=smem, size = 0x4, offset = 0x4, fixed_abs, tag = 'smem constant byte address 0x4 - core index']
  #allocation1 [shape = 'u32[144,128]{1,0:T(1,128)}', space=vmem, size = 0x12000, scoped, tag = 'internal scratch']
  %s0 = inlined_call_operand.vmem [shape: f32[16,128], index: 0, kind: input, shape index: {}]
  %s1 = inlined_call_operand.hbm [shape: f32[128,128], index: 1, kind: input, shape index: {}]
  %s2 = inlined_call_operand.vmem [shape: f32[1,128], index: 2, kind: input, shape index: {}]
  %s3 = inlined_call_operand.hbm [shape: f32[1,128,128], index: 3, kind: input, shape index: {}]
  %s4 = inlined_call_operand.vmem [shape: f32[1,1,128], index: 4, kind: input, shape index: {}]
  %s5 = inlined_call_operand.hbm [shape: f32[128,128], index: 5, kind: input, shape index: {}]
  %s6 = inlined_call_operand.vmem [shape: f32[1,128], index: 6, kind: input, shape index: {}]
  %s7 = inlined_call_operand.vmem [shape: f32[16,128], index: 7, kind: output, shape index: {0}]
  %s8 = inlined_call_operand.vmem [shape: f32[16,128], index: 8, kind: output, shape index: {1}]
  %9 = xla_tuple %s7, %s8
  %s10 = sld [smem:[#allocation0]]
  $region58: #{drnn_forward.1} parent=0
    _
  %s12 = ssub.s32 1, %s10
  %s13 = scalar_select 0, %s12, %s10
  $region1: #{drnn_forward.1} parent=0
    #allocation2 [shape = 'u8[65536]{0}', space=vmem, size = 0x10000, scoped, tag = 'input window, operand 1, single buffered']
    #allocation3 [shape = 's32[1]{0}', space=sflag, size = 0x4, scoped, tag = 'scoped memory for drnn_forward.1']
    #allocation4 [shape = 'u8[65536]{0}', space=vmem, size = 0x10000, scoped, tag = 'input window, operand 3, single buffered']
    #allocation5 [shape = 's32[1]{0}', space=sflag, size = 0x4, scoped, tag = 'scoped memory for drnn_forward.1']
    #allocation6 [shape = 'u8[65536]{0}', space=vmem, size = 0x10000, scoped, tag = 'input window, operand 5, single buffered']
    %14 = vsyncpa [#allocation3], 0
    %15 = vsyncpa [#allocation5], 0
    // Predicated region
    $region2: #{drnn_forward.1} parent=1 // pred_check
      _
    $region3: #{drnn_forward.1} parent=1 // pred_check_branch
      %17 = sbr.rel (0) target = $region5
    $region4: #{drnn_forward.1} parent=1 // pred_region
      _
    $region5: #{drnn_forward.1} parent=1 // pred_fallthru
      _
    // Predicated region
    $region6: #{drnn_forward.1} parent=1 // pred_check
      _
    $region7: #{drnn_forward.1} parent=1 // pred_check_branch
      %19 = sbr.rel (0) target = $region9
    $region8: #{drnn_forward.1} parent=1 // pred_region
      %s21 = ssub.s32 2048, 2048
      %22 = vsyncadd [#allocation3], %s21
      %s23 = sshll.u32 [#allocation2], 4
      %s24 = int_to_ptr.vmem [resolvable:$true] %s23
      %29 = dma.hbm_to_vmem [thread:$0]  %s1, 2048, %s24, [#allocation3], 128, 128, 8
    $region9: #{drnn_forward.1} parent=1 // pred_fallthru
      _
    // Predicated region
    $region10: #{drnn_forward.1} parent=1 // pred_check
      _
    $region11: #{drnn_forward.1} parent=1 // pred_check_branch
      %31 = sbr.rel (0) target = $region13
    $region12: #{drnn_forward.1} parent=1 // pred_region
      _
    $region13: #{drnn_forward.1} parent=1 // pred_fallthru
      _
    // Predicated region
    $region14: #{drnn_forward.1} parent=1 // pred_check
      _
    $region15: #{drnn_forward.1} parent=1 // pred_check_branch
      %33 = sbr.rel (0) target = $region17
    $region16: #{drnn_forward.1} parent=1 // pred_region
      %s35 = ssub.s32 2048, 2048
      %36 = vsyncadd [#allocation5], %s35
      %s37 = sshll.u32 [#allocation4], 4
      %s38 = int_to_ptr.vmem [resolvable:$true] %s37
      %43 = dma.hbm_to_vmem [thread:$0]  %s3, 2048, %s38, [#allocation5], 128, 128, 8
    $region17: #{drnn_forward.1} parent=1 // pred_fallthru
      _
    // Predicated region
    $region18: #{drnn_forward.1} parent=1 // pred_check
      _
    $region19: #{drnn_forward.1} parent=1 // pred_check_branch
      %45 = sbr.rel (0) target = $region21
    $region20: #{drnn_forward.1} parent=1 // pred_region
      _
    $region21: #{drnn_forward.1} parent=1 // pred_fallthru
      _
    // Predicated region
    $region22: #{drnn_forward.1} parent=1 // pred_check
      _
    $region23: #{drnn_forward.1} parent=1 // pred_check_branch
      %47 = sbr.rel (0) target = $region25
    $region24: #{drnn_forward.1} parent=1 // pred_region
      %s49 = ssub.s32 2048, 2048
      %50 = vsyncadd [#allocation5], %s49
      %s51 = sshll.u32 [#allocation6], 4
      %s52 = int_to_ptr.vmem [resolvable:$true] %s51
      %57 = dma.hbm_to_vmem [thread:$0]  %s5, 2048, %s52, [#allocation5], 128, 128, 8
    $region25: #{drnn_forward.1} parent=1 // pred_fallthru
      _
    // Predicated region
    $region26: #{drnn_forward.1} parent=1 // pred_check
      _
    $region27: #{drnn_forward.1} parent=1 // pred_check_branch
      %59 = sbr.rel (0) target = $region29
    $region28: #{drnn_forward.1} parent=1 // pred_region
      _
    $region29: #{drnn_forward.1} parent=1 // pred_fallthru
      _
    // Predicated region
    $region30: #{drnn_forward.1} parent=1 // pred_check
      _
    $region31: #{drnn_forward.1} parent=1 // pred_check_branch
      %61 = sbr.rel (0) target = $region33
    $region32: #{drnn_forward.1} parent=1 // pred_region
      %62 = dma.done [#allocation3], 2048
    $region33: #{drnn_forward.1} parent=1 // pred_fallthru
      _
    // Predicated region
    $region34: #{drnn_forward.1} parent=1 // pred_check
      _
    $region35: #{drnn_forward.1} parent=1 // pred_check_branch
      %64 = sbr.rel (0) target = $region37
    $region36: #{drnn_forward.1} parent=1 // pred_region
      %65 = dma.done [#allocation5], 2048
    $region37: #{drnn_forward.1} parent=1 // pred_fallthru
      _
    // Predicated region
    $region38: #{drnn_forward.1} parent=1 // pred_check
      _
    $region39: #{drnn_forward.1} parent=1 // pred_check_branch
      %67 = sbr.rel (0) target = $region41
    $region40: #{drnn_forward.1} parent=1 // pred_region
      %68 = dma.done [#allocation5], 2048
    $region41: #{drnn_forward.1} parent=1 // pred_fallthru
      _
    %v69 = vld [vmem:[%s0] sm:$0xff]
    %v70 = vld [vmem:[%s0 + $0x8] sm:$0xff]
    %v71 = vld [vmem:[#allocation2] sm:$0xff]
    %v72 = vld [vmem:[#allocation2 + $0x8] sm:$0xff]
    %v73 = vld [vmem:[#allocation2 + $0x10] sm:$0xff]
    %v74 = vld [vmem:[#allocation2 + $0x18] sm:$0xff]
    %v75 = vld [vmem:[#allocation2 + $0x20] sm:$0xff]
    %v76 = vld [vmem:[#allocation2 + $0x28] sm:$0xff]
    %v77 = vld [vmem:[#allocation2 + $0x30] sm:$0xff]
    %v78 = vld [vmem:[#allocation2 + $0x38] sm:$0xff]
    %v79 = vld [vmem:[#allocation2 + $0x40] sm:$0xff]
    %v80 = vld [vmem:[#allocation2 + $0x48] sm:$0xff]
    %v81 = vld [vmem:[#allocation2 + $0x50] sm:$0xff]
    %v82 = vld [vmem:[#allocation2 + $0x58] sm:$0xff]
    %v83 = vld [vmem:[#allocation2 + $0x60] sm:$0xff]
    %v84 = vld [vmem:[#allocation2 + $0x68] sm:$0xff]
    %v85 = vld [vmem:[#allocation2 + $0x70] sm:$0xff]
    %v86 = vld [vmem:[#allocation2 + $0x78] sm:$0xff]
    %v87 = vld [vmem:[%s2] sm:$0x1]
    %v89 = vlaneseq
    %v90 = vshrl.u32 %v89, 7
    %v91 = vsub.s32 0, %v90
    %v92 = vrot.slane %v87, %v91
    %94 = vmatprep.subr.mxu0 0.0
    %95 = vmatpush1.msra.mxu0 %v86
    %96 = vmatprep.subr.mxu0 0.0
    %97 = vmatpush1.msra.mxu0 %v85
    %98 = vmatprep.subr.mxu0 0.0
    %99 = vmatpush1.msra.mxu0 %v84
    %100 = vmatprep.subr.mxu0 0.0
    %101 = vmatpush1.msra.mxu0 %v83
    %102 = vmatprep.subr.mxu0 0.0
    %103 = vmatpush1.msra.mxu0 %v82
    %104 = vmatprep.subr.mxu0 0.0
    %105 = vmatpush1.msra.mxu0 %v81
    %106 = vmatprep.subr.mxu0 0.0
    %107 = vmatpush1.msra.mxu0 %v80
    %108 = vmatprep.subr.mxu0 0.0
    %109 = vmatpush1.msra.mxu0 %v79
    %110 = vmatprep.subr.mxu0 0.0
    %111 = vmatpush1.msra.mxu0 %v78
    %112 = vmatprep.subr.mxu0 0.0
    %113 = vmatpush1.msra.mxu0 %v77
    %114 = vmatprep.subr.mxu0 0.0
    %115 = vmatpush1.msra.mxu0 %v76
    %116 = vmatprep.subr.mxu0 0.0
    %117 = vmatpush1.msra.mxu0 %v75
    %118 = vmatprep.subr.mxu0 0.0
    %119 = vmatpush1.msra.mxu0 %v74
    %120 = vmatprep.subr.mxu0 0.0
    %121 = vmatpush1.msra.mxu0 %v73
    %122 = vmatprep.subr.mxu0 0.0
    %123 = vmatpush1.msra.mxu0 %v72
    %124 = vmatprep.subr.mxu0 0.0
    %125 = vmatpush1.msra.mxu0 %v71
    %126 = vmatprep.subr.mxu0 0.0
    %127 = vmatpush2.msra.mxu0 0.0
    %128 = vmatprep.subr.mxu0 0.0
    %129 = vmatpush2.msra.mxu0 0.0
    %130 = vmatprep.subr.mxu0 0.0
    %131 = vmatpush2.msra.mxu0 0.0
    %132 = vmatprep.subr.mxu0 0.0
    %133 = vmatpush2.msra.mxu0 0.0
    %134 = vmatprep.subr.mxu0 0.0
    %135 = vmatpush2.msra.mxu0 0.0
    %136 = vmatprep.subr.mxu0 0.0
    %137 = vmatpush2.msra.mxu0 0.0
    %138 = vmatprep.subr.mxu0 0.0
    %139 = vmatpush2.msra.mxu0 0.0
    %140 = vmatprep.subr.mxu0 0.0
    %141 = vmatpush2.msra.mxu0 0.0
    %142 = vmatprep.subr.mxu0 0.0
    %143 = vmatpush2.msra.mxu0 0.0
    %144 = vmatprep.subr.mxu0 0.0
    %145 = vmatpush2.msra.mxu0 0.0
    %146 = vmatprep.subr.mxu0 0.0
    %147 = vmatpush2.msra.mxu0 0.0
    %148 = vmatprep.subr.mxu0 0.0
    %149 = vmatpush2.msra.mxu0 0.0
    %150 = vmatprep.subr.mxu0 0.0
    %151 = vmatpush2.msra.mxu0 0.0
    %152 = vmatprep.subr.mxu0 0.0
    %153 = vmatpush2.msra.mxu0 0.0
    %154 = vmatprep.subr.mxu0 0.0
    %155 = vmatpush2.msra.mxu0 0.0
    %156 = vmatprep.subr.mxu0 0.0
    %157 = vmatpush2.msra.mxu0 0.0
    %158 = vmatprep.mubr.f32.mxu0 0.0
    %159 = vmatmul.mubr.f32.gmra.mxu0 %v69
    %v160 = vpop.f32.mrf.mxu0
    %v161 = vadd.f32 %v92, %v160
    %v162 = vpop.f32.mrf.mxu0
    %163 = vmatprep.mubr.f32.mxu0 0.0
    %164 = vmatmul.mubr.f32.gmra.mxu0 %v70
    %v165 = vpop.f32.mrf.mxu0
    %v166 = vadd.f32 %v92, %v165
    %v167 = vpop.f32.mrf.mxu0
    %168 = vdwg.mxu0
    %vm169 = vcmp.gt.f32.partialorder %v161, 0.0
    %vm170 = vcmp.gt.f32.partialorder %v166, 0.0
    %v171 = vmul.f32 %v161, 0.01
    %v172 = vmul.f32 %v166, 0.01
    %v173 = vsel %vm169, %v161, %v171
    %v174 = vsel %vm170, %v166, %v172
    %v175 = vld [vmem:[#allocation4] sm:$0xff]
    %v176 = vld [vmem:[#allocation4 + $0x8] sm:$0xff]
    %v177 = vld [vmem:[#allocation4 + $0x10] sm:$0xff]
    %v178 = vld [vmem:[#allocation4 + $0x18] sm:$0xff]
    %v179 = vld [vmem:[#allocation4 + $0x20] sm:$0xff]
    %v180 = vld [vmem:[#allocation4 + $0x28] sm:$0xff]
    %v181 = vld [vmem:[#allocation4 + $0x30] sm:$0xff]
    %v182 = vld [vmem:[#allocation4 + $0x38] sm:$0xff]
    %v183 = vld [vmem:[#allocation4 + $0x40] sm:$0xff]
    %v184 = vld [vmem:[#allocation4 + $0x48] sm:$0xff]
    %v185 = vld [vmem:[#allocation4 + $0x50] sm:$0xff]
    %v186 = vld [vmem:[#allocation4 + $0x58] sm:$0xff]
    %v187 = vld [vmem:[#allocation4 + $0x60] sm:$0xff]
    %v188 = vld [vmem:[#allocation4 + $0x68] sm:$0xff]
    %v189 = vld [vmem:[#allocation4 + $0x70] sm:$0xff]
    %v190 = vld [vmem:[#allocation4 + $0x78] sm:$0xff]
    %v191 = vld [vmem:[%s4] sm:$0x1]
    %v193 = vlaneseq
    %v194 = vshrl.u32 %v193, 7
    %v195 = vsub.s32 0, %v194
    %v196 = vrot.slane %v191, %v195
    %198 = vmatprep.subr.mxu0 0.0
    %199 = vmatpush1.msra.mxu0 %v190
    %200 = vmatprep.subr.mxu0 0.0
    %201 = vmatpush1.msra.mxu0 %v189
    %202 = vmatprep.subr.mxu0 0.0
    %203 = vmatpush1.msra.mxu0 %v188
    %204 = vmatprep.subr.mxu0 0.0
    %205 = vmatpush1.msra.mxu0 %v187
    %206 = vmatprep.subr.mxu0 0.0
    %207 = vmatpush1.msra.mxu0 %v186
    %208 = vmatprep.subr.mxu0 0.0
    %209 = vmatpush1.msra.mxu0 %v185
    %210 = vmatprep.subr.mxu0 0.0
    %211 = vmatpush1.msra.mxu0 %v184
    %212 = vmatprep.subr.mxu0 0.0
    %213 = vmatpush1.msra.mxu0 %v183
    %214 = vmatprep.subr.mxu0 0.0
    %215 = vmatpush1.msra.mxu0 %v182
    %216 = vmatprep.subr.mxu0 0.0
    %217 = vmatpush1.msra.mxu0 %v181
    %218 = vmatprep.subr.mxu0 0.0
    %219 = vmatpush1.msra.mxu0 %v180
    %220 = vmatprep.subr.mxu0 0.0
    %221 = vmatpush1.msra.mxu0 %v179
    %222 = vmatprep.subr.mxu0 0.0
    %223 = vmatpush1.msra.mxu0 %v178
    %224 = vmatprep.subr.mxu0 0.0
    %225 = vmatpush1.msra.mxu0 %v177
    %226 = vmatprep.subr.mxu0 0.0
    %227 = vmatpush1.msra.mxu0 %v176
    %228 = vmatprep.subr.mxu0 0.0
    %229 = vmatpush1.msra.mxu0 %v175
    %230 = vmatprep.subr.mxu0 0.0
    %231 = vmatpush2.msra.mxu0 0.0
    %232 = vmatprep.subr.mxu0 0.0
    %233 = vmatpush2.msra.mxu0 0.0
    %234 = vmatprep.subr.mxu0 0.0
    %235 = vmatpush2.msra.mxu0 0.0
    %236 = vmatprep.subr.mxu0 0.0
    %237 = vmatpush2.msra.mxu0 0.0
    %238 = vmatprep.subr.mxu0 0.0
    %239 = vmatpush2.msra.mxu0 0.0
    %240 = vmatprep.subr.mxu0 0.0
    %241 = vmatpush2.msra.mxu0 0.0
    %242 = vmatprep.subr.mxu0 0.0
    %243 = vmatpush2.msra.mxu0 0.0
    %244 = vmatprep.subr.mxu0 0.0
    %245 = vmatpush2.msra.mxu0 0.0
    %246 = vmatprep.subr.mxu0 0.0
    %247 = vmatpush2.msra.mxu0 0.0
    %248 = vmatprep.subr.mxu0 0.0
    %249 = vmatpush2.msra.mxu0 0.0
    %250 = vmatprep.subr.mxu0 0.0
    %251 = vmatpush2.msra.mxu0 0.0
    %252 = vmatprep.subr.mxu0 0.0
    %253 = vmatpush2.msra.mxu0 0.0
    %254 = vmatprep.subr.mxu0 0.0
    %255 = vmatpush2.msra.mxu0 0.0
    %256 = vmatprep.subr.mxu0 0.0
    %257 = vmatpush2.msra.mxu0 0.0
    %258 = vmatprep.subr.mxu0 0.0
    %259 = vmatpush2.msra.mxu0 0.0
    %260 = vmatprep.subr.mxu0 0.0
    %261 = vmatpush2.msra.mxu0 0.0
    %262 = vmatprep.mubr.f32.mxu0 0.0
    %263 = vmatmul.mubr.f32.gmra.mxu0 %v173
    %v264 = vpop.f32.mrf.mxu0
    %v265 = vadd.f32 %v196, %v264
    %v266 = vpop.f32.mrf.mxu0
    %267 = vmatprep.mubr.f32.mxu0 0.0
    %268 = vmatmul.mubr.f32.gmra.mxu0 %v174
    %v269 = vpop.f32.mrf.mxu0
    %v270 = vadd.f32 %v196, %v269
    %v271 = vpop.f32.mrf.mxu0
    %272 = vdwg.mxu0
    %vm273 = vcmp.gt.f32.partialorder %v265, 0.0
    %vm274 = vcmp.gt.f32.partialorder %v270, 0.0
    %v275 = vmul.f32 %v265, 0.01
    %v276 = vmul.f32 %v270, 0.01
    %v277 = vsel %vm273, %v265, %v275
    %v278 = vsel %vm274, %v270, %v276
    %v279 = vld [vmem:[#allocation6] sm:$0xff]
    %v280 = vld [vmem:[#allocation6 + $0x8] sm:$0xff]
    %v281 = vld [vmem:[#allocation6 + $0x10] sm:$0xff]
    %v282 = vld [vmem:[#allocation6 + $0x18] sm:$0xff]
    %v283 = vld [vmem:[#allocation6 + $0x20] sm:$0xff]
    %v284 = vld [vmem:[#allocation6 + $0x28] sm:$0xff]
    %v285 = vld [vmem:[#allocation6 + $0x30] sm:$0xff]
    %v286 = vld [vmem:[#allocation6 + $0x38] sm:$0xff]
    %v287 = vld [vmem:[#allocation6 + $0x40] sm:$0xff]
    %v288 = vld [vmem:[#allocation6 + $0x48] sm:$0xff]
    %v289 = vld [vmem:[#allocation6 + $0x50] sm:$0xff]
    %v290 = vld [vmem:[#allocation6 + $0x58] sm:$0xff]
    %v291 = vld [vmem:[#allocation6 + $0x60] sm:$0xff]
    %v292 = vld [vmem:[#allocation6 + $0x68] sm:$0xff]
    %v293 = vld [vmem:[#allocation6 + $0x70] sm:$0xff]
    %v294 = vld [vmem:[#allocation6 + $0x78] sm:$0xff]
    %v295 = vld [vmem:[%s6] sm:$0x1]
    %v297 = vlaneseq
    %v298 = vshrl.u32 %v297, 7
    %v299 = vsub.s32 0, %v298
    %v300 = vrot.slane %v295, %v299
    %302 = vmatprep.subr.mxu0 0.0
    %303 = vmatpush1.msra.mxu0 %v294
    %304 = vmatprep.subr.mxu0 0.0
    %305 = vmatpush1.msra.mxu0 %v293
    %306 = vmatprep.subr.mxu0 0.0
    %307 = vmatpush1.msra.mxu0 %v292
    %308 = vmatprep.subr.mxu0 0.0
    %309 = vmatpush1.msra.mxu0 %v291
    %310 = vmatprep.subr.mxu0 0.0
    %311 = vmatpush1.msra.mxu0 %v290
    %312 = vmatprep.subr.mxu0 0.0
    %313 = vmatpush1.msra.mxu0 %v289
    %314 = vmatprep.subr.mxu0 0.0
    %315 = vmatpush1.msra.mxu0 %v288
    %316 = vmatprep.subr.mxu0 0.0
    %317 = vmatpush1.msra.mxu0 %v287
    %318 = vmatprep.subr.mxu0 0.0
    %319 = vmatpush1.msra.mxu0 %v286
    %320 = vmatprep.subr.mxu0 0.0
    %321 = vmatpush1.msra.mxu0 %v285
    %322 = vmatprep.subr.mxu0 0.0
    %323 = vmatpush1.msra.mxu0 %v284
    %324 = vmatprep.subr.mxu0 0.0
    %325 = vmatpush1.msra.mxu0 %v283
    %326 = vmatprep.subr.mxu0 0.0
    %327 = vmatpush1.msra.mxu0 %v282
    %328 = vmatprep.subr.mxu0 0.0
    %329 = vmatpush1.msra.mxu0 %v281
    %330 = vmatprep.subr.mxu0 0.0
    %331 = vmatpush1.msra.mxu0 %v280
    %332 = vmatprep.subr.mxu0 0.0
    %333 = vmatpush1.msra.mxu0 %v279
    %334 = vmatprep.subr.mxu0 0.0
    %335 = vmatpush2.msra.mxu0 0.0
    %336 = vmatprep.subr.mxu0 0.0
    %337 = vmatpush2.msra.mxu0 0.0
    %338 = vmatprep.subr.mxu0 0.0
    %339 = vmatpush2.msra.mxu0 0.0
    %340 = vmatprep.subr.mxu0 0.0
    %341 = vmatpush2.msra.mxu0 0.0
    %342 = vmatprep.subr.mxu0 0.0
    %343 = vmatpush2.msra.mxu0 0.0
    %344 = vmatprep.subr.mxu0 0.0
    %345 = vmatpush2.msra.mxu0 0.0
    %346 = vmatprep.subr.mxu0 0.0
    %347 = vmatpush2.msra.mxu0 0.0
    %348 = vmatprep.subr.mxu0 0.0
    %349 = vmatpush2.msra.mxu0 0.0
    %350 = vmatprep.subr.mxu0 0.0
    %351 = vmatpush2.msra.mxu0 0.0
    %352 = vmatprep.subr.mxu0 0.0
    %353 = vmatpush2.msra.mxu0 0.0
    %354 = vmatprep.subr.mxu0 0.0
    %355 = vmatpush2.msra.mxu0 0.0
    %356 = vmatprep.subr.mxu0 0.0
    %357 = vmatpush2.msra.mxu0 0.0
    %358 = vmatprep.subr.mxu0 0.0
    %359 = vmatpush2.msra.mxu0 0.0
    %360 = vmatprep.subr.mxu0 0.0
    %361 = vmatpush2.msra.mxu0 0.0
    %362 = vmatprep.subr.mxu0 0.0
    %363 = vmatpush2.msra.mxu0 0.0
    %364 = vmatprep.subr.mxu0 0.0
    %365 = vmatpush2.msra.mxu0 0.0
    %366 = vmatprep.mubr.f32.mxu0 0.0
    %367 = vmatmul.mubr.f32.gmra.mxu0 %v277
    %v368 = vpop.f32.mrf.mxu0
    %v369 = vadd.f32 %v300, %v368
    %v370 = vpop.f32.mrf.mxu0
    %371 = vmatprep.mubr.f32.mxu0 0.0
    %372 = vmatmul.mubr.f32.gmra.mxu0 %v278
    %v373 = vpop.f32.mrf.mxu0
    %v374 = vadd.f32 %v300, %v373
    %v375 = vpop.f32.mrf.mxu0
    %376 = vdwg.mxu0
    %377 = vst [vmem:[%s7] sm:$0xff] %v369
    %378 = vst [vmem:[%s7 + $0x8] sm:$0xff] %v374
    %379 = vst [vmem:[%s8] sm:$0xff] %v277
    %380 = vst [vmem:[%s8 + $0x8] sm:$0xff] %v278
    // Predicated region
    $region42: #{drnn_forward.1} parent=1 // pred_check
      _
    $region43: #{drnn_forward.1} parent=1 // pred_check_branch
      %382 = sbr.rel (0) target = $region45
    $region44: #{drnn_forward.1} parent=1 // pred_region
      _
    $region45: #{drnn_forward.1} parent=1 // pred_fallthru
      _
    // Predicated region
    $region46: #{drnn_forward.1} parent=1 // pred_check
      _
    $region47: #{drnn_forward.1} parent=1 // pred_check_branch
      %384 = sbr.rel (0) target = $region49
    $region48: #{drnn_forward.1} parent=1 // pred_region
      _
    $region49: #{drnn_forward.1} parent=1 // pred_fallthru
      _
    // Predicated region
    $region50: #{drnn_forward.1} parent=1 // pred_check
      _
    $region51: #{drnn_forward.1} parent=1 // pred_check_branch
      %386 = sbr.rel (0) target = $region53
    $region52: #{drnn_forward.1} parent=1 // pred_region
      _
    $region53: #{drnn_forward.1} parent=1 // pred_fallthru
      _
    // Predicated region
    $region54: #{drnn_forward.1} parent=1 // pred_check
      _
    $region55: #{drnn_forward.1} parent=1 // pred_check_branch
      %388 = sbr.rel (0) target = $region57
    $region56: #{drnn_forward.1} parent=1 // pred_region
      _
    $region57: #{drnn_forward.1} parent=1 // pred_fallthru
      _
    %389 = vsyncpa [#allocation3], 1
    %390 = vsyncpa [#allocation5], 1

</llo_original>
